<compile_context>
chip_gen: v7x
topology: tpu7x:2x2x1
jax: 0.10.0
libtpu: 0.0.40
codegen_flags: <defaults>
</compile_context>

<pallas_src>
import functools

import jax
import jax.numpy as jnp
from jax import lax
from jax.experimental import pallas as pl
from jax.experimental.pallas import tpu as pltpu


def lstm_kernel(x_ref, wx_ref, wh_ref, b_ref, h_out_ref, xg_ref, *, T, B, H):
    # Phase 1: input projection for all timesteps as ONE MXU matmul.
    #   x_ref: (T*B, E), wx_ref: (E, 4H), b_ref: (1, 4H)  ->  xg_ref: (T*B, 4H)
    xg_ref[...] = (
        jnp.dot(x_ref[...], wx_ref[...], preferred_element_type=jnp.float32)
        + b_ref[...])

    wh = wh_ref[...]  # (H, 4H), resident across the whole recurrence

    # Phase 2: serial recurrence; only h @ Wh + elementwise per step.
    def step(t, carry):
        h, c = carry
        row = pl.multiple_of(t * B, B)  # B is a multiple of 8 (sublane aligned)
        gates = xg_ref[pl.ds(row, B), :] + jnp.dot(
            h, wh, preferred_element_type=jnp.float32)      # (B, 4H)
        # Two full-vreg transcendental passes, then slice the packed gates.
        sig = jax.nn.sigmoid(gates)
        tnh = jnp.tanh(gates)
        i_g = sig[:, 0 * H:1 * H]
        f_g = sig[:, 1 * H:2 * H]
        o_g = sig[:, 2 * H:3 * H]
        c_c = tnh[:, 3 * H:4 * H]
        c_new = f_g * c + i_g * c_c
        h_new = o_g * jnp.tanh(c_new)
        return h_new, c_new

    h0 = jnp.zeros((B, H), jnp.float32)
    c0 = jnp.zeros((B, H), jnp.float32)
    h_final, _ = lax.fori_loop(0, T, step, (h0, c0), unroll=True)
    h_out_ref[...] = h_final


@jax.jit
def lstm_forward(x_seq, wx, wh, b, w_hy, b_hy):
    # x_seq: (T, B, E) f32 (already embedded; dropout is identity at eval).
    T, B, E = x_seq.shape
    H = wh.shape[0]

    # Pad batch to a multiple of 8 sublanes (f32) so vreg/MXU rows are used.
    BP = max(8, ((B + 7) // 8) * 8)
    if BP != B:
        x_seq = jnp.concatenate(
            [x_seq, jnp.zeros((T, BP - B, E), x_seq.dtype)], axis=1)
    x_flat = x_seq.reshape(T * BP, E)

    vmem = pltpu.MemorySpace.VMEM
    h_final = pl.pallas_call(
        functools.partial(lstm_kernel, T=T, B=BP, H=H),
        out_shape=jax.ShapeDtypeStruct((BP, H), jnp.float32),
        in_specs=[pl.BlockSpec(memory_space=vmem)] * 4,
        out_specs=pl.BlockSpec(memory_space=vmem),
        scratch_shapes=[pltpu.VMEM((T * BP, 4 * H), jnp.float32)],
        # TODO(synk): at scale (large H/E), tile the 4H axis + use bf16 weights
        # to fit v7x's 64 MiB VMEM, and split batch across its two TensorCores.
    )(x_flat, wx, wh, b)

    # Tiny, lane-sparse (O=8) final projection: cheaper as a plain XLA matmul
    # than a masked partial store inside the kernel.
    return h_final[:B] @ w_hy + b_hy


def xavier_uniform(key, shape):
    fan_in, fan_out = shape
    bound = (6.0 / (fan_in + fan_out)) ** 0.5
    return jax.random.uniform(key, shape, jnp.float32, -bound, bound)


def reference_forward(x_seq, wx, wh, b, w_hy, b_hy):
    T, B, E = x_seq.shape
    H = wh.shape[0]
    h = jnp.zeros((B, H), jnp.float32)
    c = jnp.zeros((B, H), jnp.float32)
    for t in range(T):
        g = x_seq[t] @ wx + h @ wh + b
        i = jax.nn.sigmoid(g[:, 0 * H:1 * H])
        f = jax.nn.sigmoid(g[:, 1 * H:2 * H])
        o = jax.nn.sigmoid(g[:, 2 * H:3 * H])
        cc = jnp.tanh(g[:, 3 * H:4 * H])
        c = f * c + i * cc
        h = o * jnp.tanh(c)
    return h @ w_hy + b_hy


if __name__ == "__main__":
    # Small, deterministic config.
    vocab_size = 50
    input_size = 16    # embedding dim
    hidden_size = 32
    output_size = 8
    batch = 2
    seq_len = 8

    key = jax.random.PRNGKey(0)
    keys = jax.random.split(key, 12)

    embedding_matrix = jax.random.normal(keys[0], (vocab_size, input_size),
                                         jnp.float32)
    W_xi = xavier_uniform(keys[1], (input_size, hidden_size))
    W_xf = xavier_uniform(keys[2], (input_size, hidden_size))
    W_xo = xavier_uniform(keys[3], (input_size, hidden_size))
    W_xc = xavier_uniform(keys[4], (input_size, hidden_size))
    W_hi = xavier_uniform(keys[5], (hidden_size, hidden_size))
    W_hf = xavier_uniform(keys[6], (hidden_size, hidden_size))
    W_ho = xavier_uniform(keys[7], (hidden_size, hidden_size))
    W_hc = xavier_uniform(keys[8], (hidden_size, hidden_size))
    W_hy = xavier_uniform(keys[9], (hidden_size, output_size))
    b_i = b_f = b_o = b_c = jnp.zeros((hidden_size,), jnp.float32)
    b_hy = jnp.zeros((output_size,), jnp.float32)

    # Pack gate weights [i, f, o, c] along the output axis -> 4H = 128 lanes.
    Wx = jnp.concatenate([W_xi, W_xf, W_xo, W_xc], axis=1)
    Wh = jnp.concatenate([W_hi, W_hf, W_ho, W_hc], axis=1)
    b = jnp.concatenate([b_i, b_f, b_o, b_c])[None, :]       # (1, 4H)
    b_hy2 = b_hy[None, :]                                     # (1, O)

    # Token ids (batch, seq_len); embedding gather + (identity) dropout in JAX.
    # TODO(synk): training-mode dropout (p=0.5) not implemented; eval identity.
    tokens = jax.random.randint(keys[10], (batch, seq_len), 0, vocab_size,
                                dtype=jnp.int32)
    x_emb = embedding_matrix[tokens]                 # (B, T, E)
    x_seq = jnp.transpose(x_emb, (1, 0, 2))          # (T, B, E)

    out = lstm_forward(x_seq, Wx, Wh, b, W_hy, b_hy2)
    out = jax.block_until_ready(out)

    ref = reference_forward(x_seq, Wx, Wh, b, W_hy, b_hy2)
    assert out.shape == (batch, output_size)
    assert jnp.allclose(out, ref, atol=1e-5, rtol=1e-5), "mismatch vs reference"

    print("KERNEL_OK")
</pallas_src>

<mosaic_0001>
module attributes {stable_mosaic.version = 11 : i64} {
  func.func @lstm_kernel(%arg0: memref<64x16xf32, #tpu.memory_space<vmem>>, %arg1: memref<16x128xf32, #tpu.memory_space<vmem>>, %arg2: memref<32x128xf32, #tpu.memory_space<vmem>>, %arg3: memref<1x128xf32, #tpu.memory_space<vmem>>, %arg4: memref<8x32xf32, #tpu.memory_space<vmem>>, %arg5: memref<64x128xf32, #tpu.memory_space<vmem>>) attributes {dimension_semantics = [], scalar_prefetch = 0 : i64, scratch_operands = 1 : i64, tpu.core_type = #tpu.core_type<tc>} {
    %c0 = arith.constant 0 : index
    %c0_0 = arith.constant 0 : index
    %0 = vector.load %arg0[%c0, %c0_0] : memref<64x16xf32, #tpu.memory_space<vmem>>, vector<64x16xf32>
    %c0_1 = arith.constant 0 : index
    %c0_2 = arith.constant 0 : index
    %1 = vector.load %arg1[%c0_1, %c0_2] : memref<16x128xf32, #tpu.memory_space<vmem>>, vector<16x128xf32>
    %cst = arith.constant dense<0.000000e+00> : vector<64x128xf32>
    %2 = tpu.matmul %0, %1, %cst {dimension_numbers = #tpu.dot_dimension_numbers<[1], [0], [0], [1], [0, 0, 1, 1], [], []>} : vector<64x16xf32>, vector<16x128xf32>, vector<64x128xf32> -> vector<64x128xf32>
    %c0_3 = arith.constant 0 : index
    %c0_4 = arith.constant 0 : index
    %3 = vector.load %arg3[%c0_3, %c0_4] : memref<1x128xf32, #tpu.memory_space<vmem>>, vector<1x128xf32>
    %4 = vector.broadcast %3 : vector<1x128xf32> to vector<64x128xf32>
    %5 = arith.addf %2, %4 : vector<64x128xf32>
    %c0_5 = arith.constant 0 : index
    %c0_6 = arith.constant 0 : index
    %6 = vector.load %arg5[%c0_5, %c0_6] : memref<64x128xf32, #tpu.memory_space<vmem>>, vector<64x128xf32>
    tpu.vector_store %arg5[%c0_5, %c0_6], %5 {strides = array<i32>} : memref<64x128xf32, #tpu.memory_space<vmem>>, vector<64x128xf32>,
    %c0_7 = arith.constant 0 : index
    %c0_8 = arith.constant 0 : index
    %7 = vector.load %arg2[%c0_7, %c0_8] : memref<32x128xf32, #tpu.memory_space<vmem>>, vector<32x128xf32>
    %cst_9 = arith.constant 0.000000e+00 : f32
    %8 = vector.broadcast %cst_9 : f32 to vector<8x32xf32>
    %cst_10 = arith.constant 0.000000e+00 : f32
    %9 = vector.broadcast %cst_10 : f32 to vector<8x32xf32>
    %c0_i32 = arith.constant 0 : i32
    %c8_i32 = arith.constant 8 : i32
    %10 = arith.muli %c0_i32, %c8_i32 : i32
    %11 = tpu.assume_multiple %10, 8 : i32
    %12 = arith.index_cast %11 : i32 to index
    %c0_11 = arith.constant 0 : index
    %13 = vector.load %arg5[%12, %c0_11] : memref<64x128xf32, #tpu.memory_space<vmem>>, vector<8x128xf32>
    %cst_12 = arith.constant dense<0.000000e+00> : vector<8x128xf32>
    %14 = tpu.matmul %8, %7, %cst_12 {dimension_numbers = #tpu.dot_dimension_numbers<[1], [0], [0], [1], [0, 0, 1, 1], [], []>} : vector<8x32xf32>, vector<32x128xf32>, vector<8x128xf32> -> vector<8x128xf32>
    %15 = arith.addf %13, %14 : vector<8x128xf32>
    %16 = arith.negf %15 : vector<8x128xf32>
    %17 = math.exp %16 : vector<8x128xf32>
    %cst_13 = arith.constant 1.000000e+00 : f32
    %18 = vector.broadcast %cst_13 : f32 to vector<8x128xf32>
    %19 = arith.addf %18, %17 : vector<8x128xf32>
    %20 = arith.divf %18, %19 : vector<8x128xf32>
    %21 = math.tanh %15 : vector<8x128xf32>
    %22 = vector.extract_strided_slice %20 {offsets = [0, 0], sizes = [8, 32], strides = [1, 1]} : vector<8x128xf32> to vector<8x32xf32>
    %23 = vector.extract_strided_slice %20 {offsets = [0, 32], sizes = [8, 32], strides = [1, 1]} : vector<8x128xf32> to vector<8x32xf32>
    %24 = vector.extract_strided_slice %20 {offsets = [0, 64], sizes = [8, 32], strides = [1, 1]} : vector<8x128xf32> to vector<8x32xf32>
    %25 = vector.extract_strided_slice %21 {offsets = [0, 96], sizes = [8, 32], strides = [1, 1]} : vector<8x128xf32> to vector<8x32xf32>
    %26 = arith.mulf %23, %9 : vector<8x32xf32>
    %27 = arith.mulf %22, %25 : vector<8x32xf32>
    %28 = arith.addf %26, %27 : vector<8x32xf32>
    %29 = math.tanh %28 : vector<8x32xf32>
    %30 = arith.mulf %24, %29 : vector<8x32xf32>
    %c1_i32 = arith.constant 1 : i32
    %c8_i32_14 = arith.constant 8 : i32
    %31 = arith.muli %c1_i32, %c8_i32_14 : i32
    %32 = tpu.assume_multiple %31, 8 : i32
    %33 = arith.index_cast %32 : i32 to index
    %c0_15 = arith.constant 0 : index
    %34 = vector.load %arg5[%33, %c0_15] : memref<64x128xf32, #tpu.memory_space<vmem>>, vector<8x128xf32>
    %cst_16 = arith.constant dense<0.000000e+00> : vector<8x128xf32>
    %35 = tpu.matmul %30, %7, %cst_16 {dimension_numbers = #tpu.dot_dimension_numbers<[1], [0], [0], [1], [0, 0, 1, 1], [], []>} : vector<8x32xf32>, vector<32x128xf32>, vector<8x128xf32> -> vector<8x128xf32>
    %36 = arith.addf %34, %35 : vector<8x128xf32>
    %37 = arith.negf %36 : vector<8x128xf32>
    %38 = math.exp %37 : vector<8x128xf32>
    %cst_17 = arith.constant 1.000000e+00 : f32
    %39 = vector.broadcast %cst_17 : f32 to vector<8x128xf32>
    %40 = arith.addf %39, %38 : vector<8x128xf32>
    %41 = arith.divf %39, %40 : vector<8x128xf32>
    %42 = math.tanh %36 : vector<8x128xf32>
    %43 = vector.extract_strided_slice %41 {offsets = [0, 0], sizes = [8, 32], strides = [1, 1]} : vector<8x128xf32> to vector<8x32xf32>
    %44 = vector.extract_strided_slice %41 {offsets = [0, 32], sizes = [8, 32], strides = [1, 1]} : vector<8x128xf32> to vector<8x32xf32>
    %45 = vector.extract_strided_slice %41 {offsets = [0, 64], sizes = [8, 32], strides = [1, 1]} : vector<8x128xf32> to vector<8x32xf32>
    %46 = vector.extract_strided_slice %42 {offsets = [0, 96], sizes = [8, 32], strides = [1, 1]} : vector<8x128xf32> to vector<8x32xf32>
    %47 = arith.mulf %44, %28 : vector<8x32xf32>
    %48 = arith.mulf %43, %46 : vector<8x32xf32>
    %49 = arith.addf %47, %48 : vector<8x32xf32>
    %50 = math.tanh %49 : vector<8x32xf32>
    %51 = arith.mulf %45, %50 : vector<8x32xf32>
    %c2_i32 = arith.constant 2 : i32
    %c8_i32_18 = arith.constant 8 : i32
    %52 = arith.muli %c2_i32, %c8_i32_18 : i32
    %53 = tpu.assume_multiple %52, 8 : i32
    %54 = arith.index_cast %53 : i32 to index
    %c0_19 = arith.constant 0 : index
    %55 = vector.load %arg5[%54, %c0_19] : memref<64x128xf32, #tpu.memory_space<vmem>>, vector<8x128xf32>
    %cst_20 = arith.constant dense<0.000000e+00> : vector<8x128xf32>
    %56 = tpu.matmul %51, %7, %cst_20 {dimension_numbers = #tpu.dot_dimension_numbers<[1], [0], [0], [1], [0, 0, 1, 1], [], []>} : vector<8x32xf32>, vector<32x128xf32>, vector<8x128xf32> -> vector<8x128xf32>
    %57 = arith.addf %55, %56 : vector<8x128xf32>
    %58 = arith.negf %57 : vector<8x128xf32>
    %59 = math.exp %58 : vector<8x128xf32>
    %cst_21 = arith.constant 1.000000e+00 : f32
    %60 = vector.broadcast %cst_21 : f32 to vector<8x128xf32>
    %61 = arith.addf %60, %59 : vector<8x128xf32>
    %62 = arith.divf %60, %61 : vector<8x128xf32>
    %63 = math.tanh %57 : vector<8x128xf32>
    %64 = vector.extract_strided_slice %62 {offsets = [0, 0], sizes = [8, 32], strides = [1, 1]} : vector<8x128xf32> to vector<8x32xf32>
    %65 = vector.extract_strided_slice %62 {offsets = [0, 32], sizes = [8, 32], strides = [1, 1]} : vector<8x128xf32> to vector<8x32xf32>
    %66 = vector.extract_strided_slice %62 {offsets = [0, 64], sizes = [8, 32], strides = [1, 1]} : vector<8x128xf32> to vector<8x32xf32>
    %67 = vector.extract_strided_slice %63 {offsets = [0, 96], sizes = [8, 32], strides = [1, 1]} : vector<8x128xf32> to vector<8x32xf32>
    %68 = arith.mulf %65, %49 : vector<8x32xf32>
    %69 = arith.mulf %64, %67 : vector<8x32xf32>
    %70 = arith.addf %68, %69 : vector<8x32xf32>
    %71 = math.tanh %70 : vector<8x32xf32>
    %72 = arith.mulf %66, %71 : vector<8x32xf32>
    %c3_i32 = arith.constant 3 : i32
    %c8_i32_22 = arith.constant 8 : i32
    %73 = arith.muli %c3_i32, %c8_i32_22 : i32
    %74 = tpu.assume_multiple %73, 8 : i32
    %75 = arith.index_cast %74 : i32 to index
    %c0_23 = arith.constant 0 : index
    %76 = vector.load %arg5[%75, %c0_23] : memref<64x128xf32, #tpu.memory_space<vmem>>, vector<8x128xf32>
    %cst_24 = arith.constant dense<0.000000e+00> : vector<8x128xf32>
    %77 = tpu.matmul %72, %7, %cst_24 {dimension_numbers = #tpu.dot_dimension_numbers<[1], [0], [0], [1], [0, 0, 1, 1], [], []>} : vector<8x32xf32>, vector<32x128xf32>, vector<8x128xf32> -> vector<8x128xf32>
    %78 = arith.addf %76, %77 : vector<8x128xf32>
    %79 = arith.negf %78 : vector<8x128xf32>
    %80 = math.exp %79 : vector<8x128xf32>
    %cst_25 = arith.constant 1.000000e+00 : f32
    %81 = vector.broadcast %cst_25 : f32 to vector<8x128xf32>
    %82 = arith.addf %81, %80 : vector<8x128xf32>
    %83 = arith.divf %81, %82 : vector<8x128xf32>
    %84 = math.tanh %78 : vector<8x128xf32>
    %85 = vector.extract_strided_slice %83 {offsets = [0, 0], sizes = [8, 32], strides = [1, 1]} : vector<8x128xf32> to vector<8x32xf32>
    %86 = vector.extract_strided_slice %83 {offsets = [0, 32], sizes = [8, 32], strides = [1, 1]} : vector<8x128xf32> to vector<8x32xf32>
    %87 = vector.extract_strided_slice %83 {offsets = [0, 64], sizes = [8, 32], strides = [1, 1]} : vector<8x128xf32> to vector<8x32xf32>
    %88 = vector.extract_strided_slice %84 {offsets = [0, 96], sizes = [8, 32], strides = [1, 1]} : vector<8x128xf32> to vector<8x32xf32>
    %89 = arith.mulf %86, %70 : vector<8x32xf32>
    %90 = arith.mulf %85, %88 : vector<8x32xf32>
    %91 = arith.addf %89, %90 : vector<8x32xf32>
    %92 = math.tanh %91 : vector<8x32xf32>
    %93 = arith.mulf %87, %92 : vector<8x32xf32>
    %c4_i32 = arith.constant 4 : i32
    %c8_i32_26 = arith.constant 8 : i32
    %94 = arith.muli %c4_i32, %c8_i32_26 : i32
    %95 = tpu.assume_multiple %94, 8 : i32
    %96 = arith.index_cast %95 : i32 to index
    %c0_27 = arith.constant 0 : index
    %97 = vector.load %arg5[%96, %c0_27] : memref<64x128xf32, #tpu.memory_space<vmem>>, vector<8x128xf32>
    %cst_28 = arith.constant dense<0.000000e+00> : vector<8x128xf32>
    %98 = tpu.matmul %93, %7, %cst_28 {dimension_numbers = #tpu.dot_dimension_numbers<[1], [0], [0], [1], [0, 0, 1, 1], [], []>} : vector<8x32xf32>, vector<32x128xf32>, vector<8x128xf32> -> vector<8x128xf32>
    %99 = arith.addf %97, %98 : vector<8x128xf32>
    %100 = arith.negf %99 : vector<8x128xf32>
    %101 = math.exp %100 : vector<8x128xf32>
    %cst_29 = arith.constant 1.000000e+00 : f32
    %102 = vector.broadcast %cst_29 : f32 to vector<8x128xf32>
    %103 = arith.addf %102, %101 : vector<8x128xf32>
    %104 = arith.divf %102, %103 : vector<8x128xf32>
    %105 = math.tanh %99 : vector<8x128xf32>
    %106 = vector.extract_strided_slice %104 {offsets = [0, 0], sizes = [8, 32], strides = [1, 1]} : vector<8x128xf32> to vector<8x32xf32>
    %107 = vector.extract_strided_slice %104 {offsets = [0, 32], sizes = [8, 32], strides = [1, 1]} : vector<8x128xf32> to vector<8x32xf32>
    %108 = vector.extract_strided_slice %104 {offsets = [0, 64], sizes = [8, 32], strides = [1, 1]} : vector<8x128xf32> to vector<8x32xf32>
    %109 = vector.extract_strided_slice %105 {offsets = [0, 96], sizes = [8, 32], strides = [1, 1]} : vector<8x128xf32> to vector<8x32xf32>
    %110 = arith.mulf %107, %91 : vector<8x32xf32>
    %111 = arith.mulf %106, %109 : vector<8x32xf32>
    %112 = arith.addf %110, %111 : vector<8x32xf32>
    %113 = math.tanh %112 : vector<8x32xf32>
    %114 = arith.mulf %108, %113 : vector<8x32xf32>
    %c5_i32 = arith.constant 5 : i32
    %c8_i32_30 = arith.constant 8 : i32
    %115 = arith.muli %c5_i32, %c8_i32_30 : i32
    %116 = tpu.assume_multiple %115, 8 : i32
    %117 = arith.index_cast %116 : i32 to index
    %c0_31 = arith.constant 0 : index
    %118 = vector.load %arg5[%117, %c0_31] : memref<64x128xf32, #tpu.memory_space<vmem>>, vector<8x128xf32>
    %cst_32 = arith.constant dense<0.000000e+00> : vector<8x128xf32>
    %119 = tpu.matmul %114, %7, %cst_32 {dimension_numbers = #tpu.dot_dimension_numbers<[1], [0], [0], [1], [0, 0, 1, 1], [], []>} : vector<8x32xf32>, vector<32x128xf32>, vector<8x128xf32> -> vector<8x128xf32>
    %120 = arith.addf %118, %119 : vector<8x128xf32>
    %121 = arith.negf %120 : vector<8x128xf32>
    %122 = math.exp %121 : vector<8x128xf32>
    %cst_33 = arith.constant 1.000000e+00 : f32
    %123 = vector.broadcast %cst_33 : f32 to vector<8x128xf32>
    %124 = arith.addf %123, %122 : vector<8x128xf32>
    %125 = arith.divf %123, %124 : vector<8x128xf32>
    %126 = math.tanh %120 : vector<8x128xf32>
    %127 = vector.extract_strided_slice %125 {offsets = [0, 0], sizes = [8, 32], strides = [1, 1]} : vector<8x128xf32> to vector<8x32xf32>
    %128 = vector.extract_strided_slice %125 {offsets = [0, 32], sizes = [8, 32], strides = [1, 1]} : vector<8x128xf32> to vector<8x32xf32>
    %129 = vector.extract_strided_slice %125 {offsets = [0, 64], sizes = [8, 32], strides = [1, 1]} : vector<8x128xf32> to vector<8x32xf32>
    %130 = vector.extract_strided_slice %126 {offsets = [0, 96], sizes = [8, 32], strides = [1, 1]} : vector<8x128xf32> to vector<8x32xf32>
    %131 = arith.mulf %128, %112 : vector<8x32xf32>
    %132 = arith.mulf %127, %130 : vector<8x32xf32>
    %133 = arith.addf %131, %132 : vector<8x32xf32>
    %134 = math.tanh %133 : vector<8x32xf32>
    %135 = arith.mulf %129, %134 : vector<8x32xf32>
    %c6_i32 = arith.constant 6 : i32
    %c8_i32_34 = arith.constant 8 : i32
    %136 = arith.muli %c6_i32, %c8_i32_34 : i32
    %137 = tpu.assume_multiple %136, 8 : i32
    %138 = arith.index_cast %137 : i32 to index
    %c0_35 = arith.constant 0 : index
    %139 = vector.load %arg5[%138, %c0_35] : memref<64x128xf32, #tpu.memory_space<vmem>>, vector<8x128xf32>
    %cst_36 = arith.constant dense<0.000000e+00> : vector<8x128xf32>
    %140 = tpu.matmul %135, %7, %cst_36 {dimension_numbers = #tpu.dot_dimension_numbers<[1], [0], [0], [1], [0, 0, 1, 1], [], []>} : vector<8x32xf32>, vector<32x128xf32>, vector<8x128xf32> -> vector<8x128xf32>
    %141 = arith.addf %139, %140 : vector<8x128xf32>
    %142 = arith.negf %141 : vector<8x128xf32>
    %143 = math.exp %142 : vector<8x128xf32>
    %cst_37 = arith.constant 1.000000e+00 : f32
    %144 = vector.broadcast %cst_37 : f32 to vector<8x128xf32>
    %145 = arith.addf %144, %143 : vector<8x128xf32>
    %146 = arith.divf %144, %145 : vector<8x128xf32>
    %147 = math.tanh %141 : vector<8x128xf32>
    %148 = vector.extract_strided_slice %146 {offsets = [0, 0], sizes = [8, 32], strides = [1, 1]} : vector<8x128xf32> to vector<8x32xf32>
    %149 = vector.extract_strided_slice %146 {offsets = [0, 32], sizes = [8, 32], strides = [1, 1]} : vector<8x128xf32> to vector<8x32xf32>
    %150 = vector.extract_strided_slice %146 {offsets = [0, 64], sizes = [8, 32], strides = [1, 1]} : vector<8x128xf32> to vector<8x32xf32>
    %151 = vector.extract_strided_slice %147 {offsets = [0, 96], sizes = [8, 32], strides = [1, 1]} : vector<8x128xf32> to vector<8x32xf32>
    %152 = arith.mulf %149, %133 : vector<8x32xf32>
    %153 = arith.mulf %148, %151 : vector<8x32xf32>
    %154 = arith.addf %152, %153 : vector<8x32xf32>
    %155 = math.tanh %154 : vector<8x32xf32>
    %156 = arith.mulf %150, %155 : vector<8x32xf32>
    %c7_i32 = arith.constant 7 : i32
    %c8_i32_38 = arith.constant 8 : i32
    %157 = arith.muli %c7_i32, %c8_i32_38 : i32
    %158 = tpu.assume_multiple %157, 8 : i32
    %159 = arith.index_cast %158 : i32 to index
    %c0_39 = arith.constant 0 : index
    %160 = vector.load %arg5[%159, %c0_39] : memref<64x128xf32, #tpu.memory_space<vmem>>, vector<8x128xf32>
    %cst_40 = arith.constant dense<0.000000e+00> : vector<8x128xf32>
    %161 = tpu.matmul %156, %7, %cst_40 {dimension_numbers = #tpu.dot_dimension_numbers<[1], [0], [0], [1], [0, 0, 1, 1], [], []>} : vector<8x32xf32>, vector<32x128xf32>, vector<8x128xf32> -> vector<8x128xf32>
    %162 = arith.addf %160, %161 : vector<8x128xf32>
    %163 = arith.negf %162 : vector<8x128xf32>
    %164 = math.exp %163 : vector<8x128xf32>
    %cst_41 = arith.constant 1.000000e+00 : f32
    %165 = vector.broadcast %cst_41 : f32 to vector<8x128xf32>
    %166 = arith.addf %165, %164 : vector<8x128xf32>
    %167 = arith.divf %165, %166 : vector<8x128xf32>
    %168 = math.tanh %162 : vector<8x128xf32>
    %169 = vector.extract_strided_slice %167 {offsets = [0, 0], sizes = [8, 32], strides = [1, 1]} : vector<8x128xf32> to vector<8x32xf32>
    %170 = vector.extract_strided_slice %167 {offsets = [0, 32], sizes = [8, 32], strides = [1, 1]} : vector<8x128xf32> to vector<8x32xf32>
    %171 = vector.extract_strided_slice %167 {offsets = [0, 64], sizes = [8, 32], strides = [1, 1]} : vector<8x128xf32> to vector<8x32xf32>
    %172 = vector.extract_strided_slice %168 {offsets = [0, 96], sizes = [8, 32], strides = [1, 1]} : vector<8x128xf32> to vector<8x32xf32>
    %173 = arith.mulf %170, %154 : vector<8x32xf32>
    %174 = arith.mulf %169, %172 : vector<8x32xf32>
    %175 = arith.addf %173, %174 : vector<8x32xf32>
    %176 = math.tanh %175 : vector<8x32xf32>
    %177 = arith.mulf %171, %176 : vector<8x32xf32>
    %c8_i32_42 = arith.constant 8 : i32
    %c0_43 = arith.constant 0 : index
    %c0_44 = arith.constant 0 : index
    %178 = vector.load %arg4[%c0_43, %c0_44] : memref<8x32xf32, #tpu.memory_space<vmem>>, vector<8x32xf32>
    tpu.vector_store %arg4[%c0_43, %c0_44], %177 {strides = array<i32>} : memref<8x32xf32, #tpu.memory_space<vmem>>, vector<8x32xf32>,
    return
  }
}

</mosaic_0001>

<llo_original>
// kernel: lstm_forward.1
$region0: #{lstm_forward.1}
  #allocation0 [shape = 'u32[]', space=smem, size = 0x4, offset = 0x4, fixed_abs, tag = 'smem constant byte address 0x4 - core index']
  #allocation1 [shape = 'u32[144,128]{1,0:T(1,128)}', space=vmem, size = 0x12000, scoped, tag = 'internal scratch']
  #allocation2 [shape = 'f32[64,128]{1,0:T(8,128)}', space=vmem, size = 0x8000, scoped, tag = 'scratch operand']
  %s0 = inlined_call_operand.vmem [shape: f32[64,16], index: 0, kind: input, shape index: {}]
  %s1 = inlined_call_operand.vmem [shape: f32[16,128], index: 1, kind: input, shape index: {}]
  %s2 = inlined_call_operand.vmem [shape: f32[32,128], index: 2, kind: input, shape index: {}]
  %s3 = inlined_call_operand.vmem [shape: f32[1,128], index: 3, kind: input, shape index: {}]
  %s4 = inlined_call_operand.vmem [shape: f32[8,32], index: 4, kind: output, shape index: {}]
  %s5 = sld [smem:[#allocation0]]
  $region26: #{lstm_forward.1} parent=0
    _
  %s7 = ssub.s32 1, %s5
  %s8 = scalar_select 0, %s7, %s5
  // Predicated region
  $region2: #{lstm_forward.1} parent=0 // pred_check
    _
  $region3: #{lstm_forward.1} parent=0 // pred_check_branch
    %10 = sbr.rel (0) target = $region5
  $region4: #{lstm_forward.1} parent=0 // pred_region
    _
  $region5: #{lstm_forward.1} parent=0 // pred_fallthru
    _
  // Predicated region
  $region6: #{lstm_forward.1} parent=0 // pred_check
    _
  $region7: #{lstm_forward.1} parent=0 // pred_check_branch
    %12 = sbr.rel (0) target = $region9
  $region8: #{lstm_forward.1} parent=0 // pred_region
    _
  $region9: #{lstm_forward.1} parent=0 // pred_fallthru
    _
  // Predicated region
  $region10: #{lstm_forward.1} parent=0 // pred_check
    _
  $region11: #{lstm_forward.1} parent=0 // pred_check_branch
    %14 = sbr.rel (0) target = $region13
  $region12: #{lstm_forward.1} parent=0 // pred_region
    _
  $region13: #{lstm_forward.1} parent=0 // pred_fallthru
    _
  // Predicated region
  $region14: #{lstm_forward.1} parent=0 // pred_check
    _
  $region15: #{lstm_forward.1} parent=0 // pred_check_branch
    %16 = sbr.rel (0) target = $region17
  $region16: #{lstm_forward.1} parent=0 // pred_region
    _
  $region17: #{lstm_forward.1} parent=0 // pred_fallthru
    _
  %v17 = vld [vmem:[%s0] sm:$0xff]
  %v18 = vld [vmem:[%s0 + $0x8] sm:$0xff]
  %v19 = vld [vmem:[%s0 + $0x10] sm:$0xff]
  %v20 = vld [vmem:[%s0 + $0x18] sm:$0xff]
  %v21 = vld [vmem:[%s0 + $0x20] sm:$0xff]
  %v22 = vld [vmem:[%s0 + $0x28] sm:$0xff]
  %v23 = vld [vmem:[%s0 + $0x30] sm:$0xff]
  %v24 = vld [vmem:[%s0 + $0x38] sm:$0xff]
  %v25 = vld [vmem:[%s1] sm:$0xff]
  %v26 = vld [vmem:[%s1 + $0x8] sm:$0xff]
  %v27 = vld [vmem:[%s3] sm:$0x1]
  %v29 = vlaneseq
  %v30 = vshrl.u32 %v29, 7
  %v31 = vsub.s32 0, %v30
  %v32 = vrot.slane %v27, %v31
  %vm34 = vcmask 130048
  %v36 = vsel %vm34, %v17, 0
  %v39 = vsel %vm34, %v18, 0
  %v42 = vsel %vm34, %v19, 0
  %v45 = vsel %vm34, %v20, 0
  %v48 = vsel %vm34, %v21, 0
  %v51 = vsel %vm34, %v22, 0
  %v54 = vsel %vm34, %v23, 0
  %v57 = vsel %vm34, %v24, 0
  %59 = vmatprep.subr.mxu0 0.0
  %60 = vmatpush1.msra.mxu0 %v25
  %61 = vmatprep.subr.mxu0 0.0
  %62 = vmatpush1.msra.mxu0 %v26
  %63 = vmatprep.subr.mxu0 0.0
  %64 = vmatpush1.msra.mxu0 0.0
  %65 = vmatprep.subr.mxu0 0.0
  %66 = vmatpush1.msra.mxu0 0.0
  %67 = vmatprep.subr.mxu0 0.0
  %68 = vmatpush1.msra.mxu0 0.0
  %69 = vmatprep.subr.mxu0 0.0
  %70 = vmatpush1.msra.mxu0 0.0
  %71 = vmatprep.subr.mxu0 0.0
  %72 = vmatpush1.msra.mxu0 0.0
  %73 = vmatprep.subr.mxu0 0.0
  %74 = vmatpush1.msra.mxu0 0.0
  %75 = vmatprep.subr.mxu0 0.0
  %76 = vmatpush1.msra.mxu0 0.0
  %77 = vmatprep.subr.mxu0 0.0
  %78 = vmatpush1.msra.mxu0 0.0
  %79 = vmatprep.subr.mxu0 0.0
  %80 = vmatpush1.msra.mxu0 0.0
  %81 = vmatprep.subr.mxu0 0.0
  %82 = vmatpush1.msra.mxu0 0.0
  %83 = vmatprep.subr.mxu0 0.0
  %84 = vmatpush1.msra.mxu0 0.0
  %85 = vmatprep.subr.mxu0 0.0
  %86 = vmatpush1.msra.mxu0 0.0
  %87 = vmatprep.subr.mxu0 0.0
  %88 = vmatpush1.msra.mxu0 0.0
  %89 = vmatprep.subr.mxu0 0.0
  %90 = vmatpush1.msra.mxu0 0.0
  %91 = vmatprep.subr.mxu0 0.0
  %92 = vmatpush1.msra.mxu0 0.0
  %93 = vmatprep.subr.mxu0 0.0
  %94 = vmatpush1.msra.mxu0 0.0
  %95 = vmatprep.subr.mxu0 0.0
  %96 = vmatpush1.msra.mxu0 0.0
  %97 = vmatprep.subr.mxu0 0.0
  %98 = vmatpush1.msra.mxu0 0.0
  %99 = vmatprep.subr.mxu0 0.0
  %100 = vmatpush1.msra.mxu0 0.0
  %101 = vmatprep.subr.mxu0 0.0
  %102 = vmatpush1.msra.mxu0 0.0
  %103 = vmatprep.subr.mxu0 0.0
  %104 = vmatpush1.msra.mxu0 0.0
  %105 = vmatprep.subr.mxu0 0.0
  %106 = vmatpush1.msra.mxu0 0.0
  %107 = vmatprep.subr.mxu0 0.0
  %108 = vmatpush1.msra.mxu0 0.0
  %109 = vmatprep.subr.mxu0 0.0
  %110 = vmatpush1.msra.mxu0 0.0
  %111 = vmatprep.subr.mxu0 0.0
  %112 = vmatpush1.msra.mxu0 0.0
  %113 = vmatprep.subr.mxu0 0.0
  %114 = vmatpush1.msra.mxu0 0.0
  %115 = vmatprep.subr.mxu0 0.0
  %116 = vmatpush1.msra.mxu0 0.0
  %117 = vmatprep.subr.mxu0 0.0
  %118 = vmatpush1.msra.mxu0 0.0
  %119 = vmatprep.subr.mxu0 0.0
  %120 = vmatpush1.msra.mxu0 0.0
  %121 = vmatprep.subr.mxu0 0.0
  %122 = vmatpush1.msra.mxu0 0.0
  %123 = vmatprep.mubr.f32.mxu0 0.0
  %124 = vmatmul.mubr.f32.gmra.mrb[0].mxu0 %v36
  %v125 = vpop.f32.mrb[0].mxu0
  %v126 = vadd.f32 %v32, %v125
  %v127 = vpop.f32.mrb[0].mxu0
  %128 = vmatprep.mubr.f32.mxu0 0.0
  %129 = vmatmul.mubr.f32.gmra.mrb[0].mxu0 %v39
  %v130 = vpop.f32.mrb[0].mxu0
  %v131 = vadd.f32 %v32, %v130
  %v132 = vpop.f32.mrb[0].mxu0
  %133 = vmatprep.mubr.f32.mxu0 0.0
  %134 = vmatmul.mubr.f32.gmra.mrb[0].mxu0 %v42
  %v135 = vpop.f32.mrb[0].mxu0
  %v136 = vadd.f32 %v32, %v135
  %v137 = vpop.f32.mrb[0].mxu0
  %138 = vmatprep.mubr.f32.mxu0 0.0
  %139 = vmatmul.mubr.f32.gmra.mrb[0].mxu0 %v45
  %v140 = vpop.f32.mrb[0].mxu0
  %v141 = vadd.f32 %v32, %v140
  %v142 = vpop.f32.mrb[0].mxu0
  %143 = vmatprep.mubr.f32.mxu0 0.0
  %144 = vmatmul.mubr.f32.gmra.mrb[0].mxu0 %v48
  %v145 = vpop.f32.mrb[0].mxu0
  %v146 = vadd.f32 %v32, %v145
  %v147 = vpop.f32.mrb[0].mxu0
  %148 = vmatprep.mubr.f32.mxu0 0.0
  %149 = vmatmul.mubr.f32.gmra.mrb[0].mxu0 %v51
  %v150 = vpop.f32.mrb[0].mxu0
  %v151 = vadd.f32 %v32, %v150
  %v152 = vpop.f32.mrb[0].mxu0
  %153 = vmatprep.mubr.f32.mxu0 0.0
  %154 = vmatmul.mubr.f32.gmra.mrb[0].mxu0 %v54
  %v155 = vpop.f32.mrb[0].mxu0
  %v156 = vadd.f32 %v32, %v155
  %v157 = vpop.f32.mrb[0].mxu0
  %158 = vmatprep.mubr.f32.mxu0 0.0
  %159 = vmatmul.mubr.f32.gmra.mrb[0].mxu0 %v57
  %v160 = vpop.f32.mrb[0].mxu0
  %v161 = vadd.f32 %v32, %v160
  %v162 = vpop.f32.mrb[0].mxu0
  %163 = vdwg.mxu0
  %164 = vst [vmem:[#allocation2] sm:$0xff] %v126
  %165 = vst [vmem:[#allocation2 + $0x8] sm:$0xff] %v131
  %166 = vst [vmem:[#allocation2 + $0x10] sm:$0xff] %v136
  %167 = vst [vmem:[#allocation2 + $0x18] sm:$0xff] %v141
  %168 = vst [vmem:[#allocation2 + $0x20] sm:$0xff] %v146
  %169 = vst [vmem:[#allocation2 + $0x28] sm:$0xff] %v151
  %170 = vst [vmem:[#allocation2 + $0x30] sm:$0xff] %v156
  %171 = vst [vmem:[#allocation2 + $0x38] sm:$0xff] %v161
  %v172 = vld [vmem:[%s2] sm:$0xff]
  %v173 = vld [vmem:[%s2 + $0x8] sm:$0xff]
  %v174 = vld [vmem:[%s2 + $0x10] sm:$0xff]
  %v175 = vld [vmem:[%s2 + $0x18] sm:$0xff]
  %v176 = vld [vmem:[#allocation2] sm:$0xff]
  %vm177 = vcmask 261120
  %v179 = vsel %vm177, 0.0, 0
  %181 = vmatprep.subr.mxu0 0.0
  %182 = vmatpush1.msra.mxu0 %v172
  %183 = vmatprep.subr.mxu0 0.0
  %184 = vmatpush1.msra.mxu0 %v173
  %185 = vmatprep.subr.mxu0 0.0
  %186 = vmatpush1.msra.mxu0 %v174
  %187 = vmatprep.subr.mxu0 0.0
  %188 = vmatpush1.msra.mxu0 %v175
  %189 = vmatprep.subr.mxu0 0.0
  %190 = vmatpush1.msra.mxu0 0.0
  %191 = vmatprep.subr.mxu0 0.0
  %192 = vmatpush1.msra.mxu0 0.0
  %193 = vmatprep.subr.mxu0 0.0
  %194 = vmatpush1.msra.mxu0 0.0
  %195 = vmatprep.subr.mxu0 0.0
  %196 = vmatpush1.msra.mxu0 0.0
  %197 = vmatprep.subr.mxu0 0.0
  %198 = vmatpush1.msra.mxu0 0.0
  %199 = vmatprep.subr.mxu0 0.0
  %200 = vmatpush1.msra.mxu0 0.0
  %201 = vmatprep.subr.mxu0 0.0
  %202 = vmatpush1.msra.mxu0 0.0
  %203 = vmatprep.subr.mxu0 0.0
  %204 = vmatpush1.msra.mxu0 0.0
  %205 = vmatprep.subr.mxu0 0.0
  %206 = vmatpush1.msra.mxu0 0.0
  %207 = vmatprep.subr.mxu0 0.0
  %208 = vmatpush1.msra.mxu0 0.0
  %209 = vmatprep.subr.mxu0 0.0
  %210 = vmatpush1.msra.mxu0 0.0
  %211 = vmatprep.subr.mxu0 0.0
  %212 = vmatpush1.msra.mxu0 0.0
  %213 = vmatprep.subr.mxu0 0.0
  %214 = vmatpush1.msra.mxu0 0.0
  %215 = vmatprep.subr.mxu0 0.0
  %216 = vmatpush1.msra.mxu0 0.0
  %217 = vmatprep.subr.mxu0 0.0
  %218 = vmatpush1.msra.mxu0 0.0
  %219 = vmatprep.subr.mxu0 0.0
  %220 = vmatpush1.msra.mxu0 0.0
  %221 = vmatprep.subr.mxu0 0.0
  %222 = vmatpush1.msra.mxu0 0.0
  %223 = vmatprep.subr.mxu0 0.0
  %224 = vmatpush1.msra.mxu0 0.0
  %225 = vmatprep.subr.mxu0 0.0
  %226 = vmatpush1.msra.mxu0 0.0
  %227 = vmatprep.subr.mxu0 0.0
  %228 = vmatpush1.msra.mxu0 0.0
  %229 = vmatprep.subr.mxu0 0.0
  %230 = vmatpush1.msra.mxu0 0.0
  %231 = vmatprep.subr.mxu0 0.0
  %232 = vmatpush1.msra.mxu0 0.0
  %233 = vmatprep.subr.mxu0 0.0
  %234 = vmatpush1.msra.mxu0 0.0
  %235 = vmatprep.subr.mxu0 0.0
  %236 = vmatpush1.msra.mxu0 0.0
  %237 = vmatprep.subr.mxu0 0.0
  %238 = vmatpush1.msra.mxu0 0.0
  %239 = vmatprep.subr.mxu0 0.0
  %240 = vmatpush1.msra.mxu0 0.0
  %241 = vmatprep.subr.mxu0 0.0
  %242 = vmatpush1.msra.mxu0 0.0
  %243 = vmatprep.subr.mxu0 0.0
  %244 = vmatpush1.msra.mxu0 0.0
  %245 = vmatprep.mubr.f32.mxu0 0.0
  %246 = vmatmul.mubr.f32.gmra.mrb[0].mxu0 %v179
  %v247 = vpop.f32.mrb[0].mxu0
  %v248 = vadd.f32 0.0, %v247
  %v249 = vpop.f32.mrb[0].mxu0
  %250 = vdwg.mxu0
  %v251 = vadd.f32 %v176, %v248
  %v252 = vxor.u32 %v251, 2147483648
  %v253 = vmul.f32 %v252, 1.442695
  %v254 = vpow.pop %v253
  %v255 = vadd.f32 %v254, 1.0
  %v256 = vrcp.pop %v255
  %v257 = vmul.f32 1.0, %v256
  %v258 = vtanh.pop %v251
  %v259 = vmul.f32 %v257, 0.0
  %261 = vrot.lane.b32.xlu0 %v258, 32
  %v262 = vpop.permute.xlu0 %261
  %v264 = vmul.f32 %v257, %v262
  %266 = vrot.lane.b32.xlu0 %v264, 32
  %v267 = vpop.permute.xlu0 %266
  %v269 = vadd.f32 %v259, %v267
  %v270 = vtanh.pop %v269
  %272 = vrot.lane.b32.xlu0 %v270, 32
  %v273 = vpop.permute.xlu0 %272
  %v275 = vmul.f32 %v257, %v273
  %s276 = scalar_lea.vmem [#allocation2], 8
  %v277 = vld [vmem:[%s276] sm:$0xff]
  %279 = vrot.lane.b32.xlu0 %v275, 64
  %v280 = vpop.permute.xlu0 %279
  %v281 = vsel %vm177, %v280, 0
  %283 = vmatprep.subr.mxu0 0.0
  %284 = vmatpush1.msra.mxu0 %v172
  %285 = vmatprep.subr.mxu0 0.0
  %286 = vmatpush1.msra.mxu0 %v173
  %287 = vmatprep.subr.mxu0 0.0
  %288 = vmatpush1.msra.mxu0 %v174
  %289 = vmatprep.subr.mxu0 0.0
  %290 = vmatpush1.msra.mxu0 %v175
  %291 = vmatprep.subr.mxu0 0.0
  %292 = vmatpush1.msra.mxu0 0.0
  %293 = vmatprep.subr.mxu0 0.0
  %294 = vmatpush1.msra.mxu0 0.0
  %295 = vmatprep.subr.mxu0 0.0
  %296 = vmatpush1.msra.mxu0 0.0
  %297 = vmatprep.subr.mxu0 0.0
  %298 = vmatpush1.msra.mxu0 0.0
  %299 = vmatprep.subr.mxu0 0.0
  %300 = vmatpush1.msra.mxu0 0.0
  %301 = vmatprep.subr.mxu0 0.0
  %302 = vmatpush1.msra.mxu0 0.0
  %303 = vmatprep.subr.mxu0 0.0
  %304 = vmatpush1.msra.mxu0 0.0
  %305 = vmatprep.subr.mxu0 0.0
  %306 = vmatpush1.msra.mxu0 0.0
  %307 = vmatprep.subr.mxu0 0.0
  %308 = vmatpush1.msra.mxu0 0.0
  %309 = vmatprep.subr.mxu0 0.0
  %310 = vmatpush1.msra.mxu0 0.0
  %311 = vmatprep.subr.mxu0 0.0
  %312 = vmatpush1.msra.mxu0 0.0
  %313 = vmatprep.subr.mxu0 0.0
  %314 = vmatpush1.msra.mxu0 0.0
  %315 = vmatprep.subr.mxu0 0.0
  %316 = vmatpush1.msra.mxu0 0.0
  %317 = vmatprep.subr.mxu0 0.0
  %318 = vmatpush1.msra.mxu0 0.0
  %319 = vmatprep.subr.mxu0 0.0
  %320 = vmatpush1.msra.mxu0 0.0
  %321 = vmatprep.subr.mxu0 0.0
  %322 = vmatpush1.msra.mxu0 0.0
  %323 = vmatprep.subr.mxu0 0.0
  %324 = vmatpush1.msra.mxu0 0.0
  %325 = vmatprep.subr.mxu0 0.0
  %326 = vmatpush1.msra.mxu0 0.0
  %327 = vmatprep.subr.mxu0 0.0
  %328 = vmatpush1.msra.mxu0 0.0
  %329 = vmatprep.subr.mxu0 0.0
  %330 = vmatpush1.msra.mxu0 0.0
  %331 = vmatprep.subr.mxu0 0.0
  %332 = vmatpush1.msra.mxu0 0.0
  %333 = vmatprep.subr.mxu0 0.0
  %334 = vmatpush1.msra.mxu0 0.0
  %335 = vmatprep.subr.mxu0 0.0
  %336 = vmatpush1.msra.mxu0 0.0
  %337 = vmatprep.subr.mxu0 0.0
  %338 = vmatpush1.msra.mxu0 0.0
  %339 = vmatprep.subr.mxu0 0.0
  %340 = vmatpush1.msra.mxu0 0.0
  %341 = vmatprep.subr.mxu0 0.0
  %342 = vmatpush1.msra.mxu0 0.0
  %343 = vmatprep.subr.mxu0 0.0
  %344 = vmatpush1.msra.mxu0 0.0
  %345 = vmatprep.subr.mxu0 0.0
  %346 = vmatpush1.msra.mxu0 0.0
  %347 = vmatprep.mubr.f32.mxu0 0.0
  %348 = vmatmul.mubr.f32.gmra.mrb[0].mxu0 %v281
  %v349 = vpop.f32.mrb[0].mxu0
  %v350 = vadd.f32 0.0, %v349
  %v351 = vpop.f32.mrb[0].mxu0
  %352 = vdwg.mxu0
  %v353 = vadd.f32 %v277, %v350
  %v354 = vxor.u32 %v353, 2147483648
  %v355 = vmul.f32 %v354, 1.442695
  %v356 = vpow.pop %v355
  %v357 = vadd.f32 %v356, 1.0
  %v358 = vrcp.pop %v357
  %v359 = vmul.f32 1.0, %v358
  %v360 = vtanh.pop %v353
  %v361 = vmul.f32 %v359, %v269
  %363 = vrot.lane.b32.xlu0 %v360, 32
  %v364 = vpop.permute.xlu0 %363
  %v366 = vmul.f32 %v359, %v364
  %368 = vrot.lane.b32.xlu0 %v366, 32
  %v369 = vpop.permute.xlu0 %368
  %v371 = vadd.f32 %v361, %v369
  %v372 = vtanh.pop %v371
  %374 = vrot.lane.b32.xlu0 %v372, 32
  %v375 = vpop.permute.xlu0 %374
  %v377 = vmul.f32 %v359, %v375
  %s378 = scalar_lea.vmem [#allocation2], 16
  %v379 = vld [vmem:[%s378] sm:$0xff]
  %381 = vrot.lane.b32.xlu0 %v377, 64
  %v382 = vpop.permute.xlu0 %381
  %v383 = vsel %vm177, %v382, 0
  %385 = vmatprep.subr.mxu0 0.0
  %386 = vmatpush1.msra.mxu0 %v172
  %387 = vmatprep.subr.mxu0 0.0
  %388 = vmatpush1.msra.mxu0 %v173
  %389 = vmatprep.subr.mxu0 0.0
  %390 = vmatpush1.msra.mxu0 %v174
  %391 = vmatprep.subr.mxu0 0.0
  %392 = vmatpush1.msra.mxu0 %v175
  %393 = vmatprep.subr.mxu0 0.0
  %394 = vmatpush1.msra.mxu0 0.0
  %395 = vmatprep.subr.mxu0 0.0
  %396 = vmatpush1.msra.mxu0 0.0
  %397 = vmatprep.subr.mxu0 0.0
  %398 = vmatpush1.msra.mxu0 0.0
  %399 = vmatprep.subr.mxu0 0.0
  %400 = vmatpush1.msra.mxu0 0.0
  %401 = vmatprep.subr.mxu0 0.0
  %402 = vmatpush1.msra.mxu0 0.0
  %403 = vmatprep.subr.mxu0 0.0
  %404 = vmatpush1.msra.mxu0 0.0
  %405 = vmatprep.subr.mxu0 0.0
  %406 = vmatpush1.msra.mxu0 0.0
  %407 = vmatprep.subr.mxu0 0.0
  %408 = vmatpush1.msra.mxu0 0.0
  %409 = vmatprep.subr.mxu0 0.0
  %410 = vmatpush1.msra.mxu0 0.0
  %411 = vmatprep.subr.mxu0 0.0
  %412 = vmatpush1.msra.mxu0 0.0
  %413 = vmatprep.subr.mxu0 0.0
  %414 = vmatpush1.msra.mxu0 0.0
  %415 = vmatprep.subr.mxu0 0.0
  %416 = vmatpush1.msra.mxu0 0.0
  %417 = vmatprep.subr.mxu0 0.0
  %418 = vmatpush1.msra.mxu0 0.0
  %419 = vmatprep.subr.mxu0 0.0
  %420 = vmatpush1.msra.mxu0 0.0
  %421 = vmatprep.subr.mxu0 0.0
  %422 = vmatpush1.msra.mxu0 0.0
  %423 = vmatprep.subr.mxu0 0.0
  %424 = vmatpush1.msra.mxu0 0.0
  %425 = vmatprep.subr.mxu0 0.0
  %426 = vmatpush1.msra.mxu0 0.0
  %427 = vmatprep.subr.mxu0 0.0
  %428 = vmatpush1.msra.mxu0 0.0
  %429 = vmatprep.subr.mxu0 0.0
  %430 = vmatpush1.msra.mxu0 0.0
  %431 = vmatprep.subr.mxu0 0.0
  %432 = vmatpush1.msra.mxu0 0.0
  %433 = vmatprep.subr.mxu0 0.0
  %434 = vmatpush1.msra.mxu0 0.0
  %435 = vmatprep.subr.mxu0 0.0
  %436 = vmatpush1.msra.mxu0 0.0
  %437 = vmatprep.subr.mxu0 0.0
  %438 = vmatpush1.msra.mxu0 0.0
  %439 = vmatprep.subr.mxu0 0.0
  %440 = vmatpush1.msra.mxu0 0.0
  %441 = vmatprep.subr.mxu0 0.0
  %442 = vmatpush1.msra.mxu0 0.0
  %443 = vmatprep.subr.mxu0 0.0
  %444 = vmatpush1.msra.mxu0 0.0
  %445 = vmatprep.subr.mxu0 0.0
  %446 = vmatpush1.msra.mxu0 0.0
  %447 = vmatprep.subr.mxu0 0.0
  %448 = vmatpush1.msra.mxu0 0.0
  %449 = vmatprep.mubr.f32.mxu0 0.0
  %450 = vmatmul.mubr.f32.gmra.mrb[0].mxu0 %v383
  %v451 = vpop.f32.mrb[0].mxu0
  %v452 = vadd.f32 0.0, %v451
  %v453 = vpop.f32.mrb[0].mxu0
  %454 = vdwg.mxu0
  %v455 = vadd.f32 %v379, %v452
  %v456 = vxor.u32 %v455, 2147483648
  %v457 = vmul.f32 %v456, 1.442695
  %v458 = vpow.pop %v457
  %v459 = vadd.f32 %v458, 1.0
  %v460 = vrcp.pop %v459
  %v461 = vmul.f32 1.0, %v460
  %v462 = vtanh.pop %v455
  %v463 = vmul.f32 %v461, %v371
  %465 = vrot.lane.b32.xlu0 %v462, 32
  %v466 = vpop.permute.xlu0 %465
  %v468 = vmul.f32 %v461, %v466
  %470 = vrot.lane.b32.xlu0 %v468, 32
  %v471 = vpop.permute.xlu0 %470
  %v473 = vadd.f32 %v463, %v471
  %v474 = vtanh.pop %v473
  %476 = vrot.lane.b32.xlu0 %v474, 32
  %v477 = vpop.permute.xlu0 %476
  %v479 = vmul.f32 %v461, %v477
  %s480 = scalar_lea.vmem [#allocation2], 24
  %v481 = vld [vmem:[%s480] sm:$0xff]
  %483 = vrot.lane.b32.xlu0 %v479, 64
  %v484 = vpop.permute.xlu0 %483
  %v485 = vsel %vm177, %v484, 0
  %487 = vmatprep.subr.mxu0 0.0
  %488 = vmatpush1.msra.mxu0 %v172
  %489 = vmatprep.subr.mxu0 0.0
  %490 = vmatpush1.msra.mxu0 %v173
  %491 = vmatprep.subr.mxu0 0.0
  %492 = vmatpush1.msra.mxu0 %v174
  %493 = vmatprep.subr.mxu0 0.0
  %494 = vmatpush1.msra.mxu0 %v175
  %495 = vmatprep.subr.mxu0 0.0
  %496 = vmatpush1.msra.mxu0 0.0
  %497 = vmatprep.subr.mxu0 0.0
  %498 = vmatpush1.msra.mxu0 0.0
  %499 = vmatprep.subr.mxu0 0.0
  %500 = vmatpush1.msra.mxu0 0.0
  %501 = vmatprep.subr.mxu0 0.0
  %502 = vmatpush1.msra.mxu0 0.0
  %503 = vmatprep.subr.mxu0 0.0
  %504 = vmatpush1.msra.mxu0 0.0
  %505 = vmatprep.subr.mxu0 0.0
  %506 = vmatpush1.msra.mxu0 0.0
  %507 = vmatprep.subr.mxu0 0.0
  %508 = vmatpush1.msra.mxu0 0.0
  %509 = vmatprep.subr.mxu0 0.0
  %510 = vmatpush1.msra.mxu0 0.0
  %511 = vmatprep.subr.mxu0 0.0
  %512 = vmatpush1.msra.mxu0 0.0
  %513 = vmatprep.subr.mxu0 0.0
  %514 = vmatpush1.msra.mxu0 0.0
  %515 = vmatprep.subr.mxu0 0.0
  %516 = vmatpush1.msra.mxu0 0.0
  %517 = vmatprep.subr.mxu0 0.0
  %518 = vmatpush1.msra.mxu0 0.0
  %519 = vmatprep.subr.mxu0 0.0
  %520 = vmatpush1.msra.mxu0 0.0
  %521 = vmatprep.subr.mxu0 0.0
  %522 = vmatpush1.msra.mxu0 0.0
  %523 = vmatprep.subr.mxu0 0.0
  %524 = vmatpush1.msra.mxu0 0.0
  %525 = vmatprep.subr.mxu0 0.0
  %526 = vmatpush1.msra.mxu0 0.0
  %527 = vmatprep.subr.mxu0 0.0
  %528 = vmatpush1.msra.mxu0 0.0
  %529 = vmatprep.subr.mxu0 0.0
  %530 = vmatpush1.msra.mxu0 0.0
  %531 = vmatprep.subr.mxu0 0.0
  %532 = vmatpush1.msra.mxu0 0.0
  %533 = vmatprep.subr.mxu0 0.0
  %534 = vmatpush1.msra.mxu0 0.0
  %535 = vmatprep.subr.mxu0 0.0
  %536 = vmatpush1.msra.mxu0 0.0
  %537 = vmatprep.subr.mxu0 0.0
  %538 = vmatpush1.msra.mxu0 0.0
  %539 = vmatprep.subr.mxu0 0.0
  %540 = vmatpush1.msra.mxu0 0.0
  %541 = vmatprep.subr.mxu0 0.0
  %542 = vmatpush1.msra.mxu0 0.0
  %543 = vmatprep.subr.mxu0 0.0
  %544 = vmatpush1.msra.mxu0 0.0
  %545 = vmatprep.subr.mxu0 0.0
  %546 = vmatpush1.msra.mxu0 0.0
  %547 = vmatprep.subr.mxu0 0.0
  %548 = vmatpush1.msra.mxu0 0.0
  %549 = vmatprep.subr.mxu0 0.0
  %550 = vmatpush1.msra.mxu0 0.0
  %551 = vmatprep.mubr.f32.mxu0 0.0
  %552 = vmatmul.mubr.f32.gmra.mrb[0].mxu0 %v485
  %v553 = vpop.f32.mrb[0].mxu0
  %v554 = vadd.f32 0.0, %v553
  %v555 = vpop.f32.mrb[0].mxu0
  %556 = vdwg.mxu0
  %v557 = vadd.f32 %v481, %v554
  %v558 = vxor.u32 %v557, 2147483648
  %v559 = vmul.f32 %v558, 1.442695
  %v560 = vpow.pop %v559
  %v561 = vadd.f32 %v560, 1.0
  %v562 = vrcp.pop %v561
  %v563 = vmul.f32 1.0, %v562
  %v564 = vtanh.pop %v557
  %v565 = vmul.f32 %v563, %v473
  %567 = vrot.lane.b32.xlu0 %v564, 32
  %v568 = vpop.permute.xlu0 %567
  %v570 = vmul.f32 %v563, %v568
  %572 = vrot.lane.b32.xlu0 %v570, 32
  %v573 = vpop.permute.xlu0 %572
  %v575 = vadd.f32 %v565, %v573
  %v576 = vtanh.pop %v575
  %578 = vrot.lane.b32.xlu0 %v576, 32
  %v579 = vpop.permute.xlu0 %578
  %v581 = vmul.f32 %v563, %v579
  %s582 = scalar_lea.vmem [#allocation2], 32
  %v583 = vld [vmem:[%s582] sm:$0xff]
  %585 = vrot.lane.b32.xlu0 %v581, 64
  %v586 = vpop.permute.xlu0 %585
  %v587 = vsel %vm177, %v586, 0
  %589 = vmatprep.subr.mxu0 0.0
  %590 = vmatpush1.msra.mxu0 %v172
  %591 = vmatprep.subr.mxu0 0.0
  %592 = vmatpush1.msra.mxu0 %v173
  %593 = vmatprep.subr.mxu0 0.0
  %594 = vmatpush1.msra.mxu0 %v174
  %595 = vmatprep.subr.mxu0 0.0
  %596 = vmatpush1.msra.mxu0 %v175
  %597 = vmatprep.subr.mxu0 0.0
  %598 = vmatpush1.msra.mxu0 0.0
  %599 = vmatprep.subr.mxu0 0.0
  %600 = vmatpush1.msra.mxu0 0.0
  %601 = vmatprep.subr.mxu0 0.0
  %602 = vmatpush1.msra.mxu0 0.0
  %603 = vmatprep.subr.mxu0 0.0
  %604 = vmatpush1.msra.mxu0 0.0
  %605 = vmatprep.subr.mxu0 0.0
  %606 = vmatpush1.msra.mxu0 0.0
  %607 = vmatprep.subr.mxu0 0.0
  %608 = vmatpush1.msra.mxu0 0.0
  %609 = vmatprep.subr.mxu0 0.0
  %610 = vmatpush1.msra.mxu0 0.0
  %611 = vmatprep.subr.mxu0 0.0
  %612 = vmatpush1.msra.mxu0 0.0
  %613 = vmatprep.subr.mxu0 0.0
  %614 = vmatpush1.msra.mxu0 0.0
  %615 = vmatprep.subr.mxu0 0.0
  %616 = vmatpush1.msra.mxu0 0.0
  %617 = vmatprep.subr.mxu0 0.0
  %618 = vmatpush1.msra.mxu0 0.0
  %619 = vmatprep.subr.mxu0 0.0
  %620 = vmatpush1.msra.mxu0 0.0
  %621 = vmatprep.subr.mxu0 0.0
  %622 = vmatpush1.msra.mxu0 0.0
  %623 = vmatprep.subr.mxu0 0.0
  %624 = vmatpush1.msra.mxu0 0.0
  %625 = vmatprep.subr.mxu0 0.0
  %626 = vmatpush1.msra.mxu0 0.0
  %627 = vmatprep.subr.mxu0 0.0
  %628 = vmatpush1.msra.mxu0 0.0
  %629 = vmatprep.subr.mxu0 0.0
  %630 = vmatpush1.msra.mxu0 0.0
  %631 = vmatprep.subr.mxu0 0.0
  %632 = vmatpush1.msra.mxu0 0.0
  %633 = vmatprep.subr.mxu0 0.0
  %634 = vmatpush1.msra.mxu0 0.0
  %635 = vmatprep.subr.mxu0 0.0
  %636 = vmatpush1.msra.mxu0 0.0
  %637 = vmatprep.subr.mxu0 0.0
  %638 = vmatpush1.msra.mxu0 0.0
  %639 = vmatprep.subr.mxu0 0.0
  %640 = vmatpush1.msra.mxu0 0.0
  %641 = vmatprep.subr.mxu0 0.0
  %642 = vmatpush1.msra.mxu0 0.0
  %643 = vmatprep.subr.mxu0 0.0
  %644 = vmatpush1.msra.mxu0 0.0
  %645 = vmatprep.subr.mxu0 0.0
  %646 = vmatpush1.msra.mxu0 0.0
  %647 = vmatprep.subr.mxu0 0.0
  %648 = vmatpush1.msra.mxu0 0.0
  %649 = vmatprep.subr.mxu0 0.0
  %650 = vmatpush1.msra.mxu0 0.0
  %651 = vmatprep.subr.mxu0 0.0
  %652 = vmatpush1.msra.mxu0 0.0
  %653 = vmatprep.mubr.f32.mxu0 0.0
  %654 = vmatmul.mubr.f32.gmra.mrb[0].mxu0 %v587
  %v655 = vpop.f32.mrb[0].mxu0
  %v656 = vadd.f32 0.0, %v655
  %v657 = vpop.f32.mrb[0].mxu0
  %658 = vdwg.mxu0
  %v659 = vadd.f32 %v583, %v656
  %v660 = vxor.u32 %v659, 2147483648
  %v661 = vmul.f32 %v660, 1.442695
  %v662 = vpow.pop %v661
  %v663 = vadd.f32 %v662, 1.0
  %v664 = vrcp.pop %v663
  %v665 = vmul.f32 1.0, %v664
  %v666 = vtanh.pop %v659
  %v667 = vmul.f32 %v665, %v575
  %669 = vrot.lane.b32.xlu0 %v666, 32
  %v670 = vpop.permute.xlu0 %669
  %v672 = vmul.f32 %v665, %v670
  %674 = vrot.lane.b32.xlu0 %v672, 32
  %v675 = vpop.permute.xlu0 %674
  %v677 = vadd.f32 %v667, %v675
  %v678 = vtanh.pop %v677
  %680 = vrot.lane.b32.xlu0 %v678, 32
  %v681 = vpop.permute.xlu0 %680
  %v683 = vmul.f32 %v665, %v681
  %s684 = scalar_lea.vmem [#allocation2], 40
  %v685 = vld [vmem:[%s684] sm:$0xff]
  %687 = vrot.lane.b32.xlu0 %v683, 64
  %v688 = vpop.permute.xlu0 %687
  %v689 = vsel %vm177, %v688, 0
  %691 = vmatprep.subr.mxu0 0.0
  %692 = vmatpush1.msra.mxu0 %v172
  %693 = vmatprep.subr.mxu0 0.0
  %694 = vmatpush1.msra.mxu0 %v173
  %695 = vmatprep.subr.mxu0 0.0
  %696 = vmatpush1.msra.mxu0 %v174
  %697 = vmatprep.subr.mxu0 0.0
  %698 = vmatpush1.msra.mxu0 %v175
  %699 = vmatprep.subr.mxu0 0.0
  %700 = vmatpush1.msra.mxu0 0.0
  %701 = vmatprep.subr.mxu0 0.0
  %702 = vmatpush1.msra.mxu0 0.0
  %703 = vmatprep.subr.mxu0 0.0
  %704 = vmatpush1.msra.mxu0 0.0
  %705 = vmatprep.subr.mxu0 0.0
  %706 = vmatpush1.msra.mxu0 0.0
  %707 = vmatprep.subr.mxu0 0.0
  %708 = vmatpush1.msra.mxu0 0.0
  %709 = vmatprep.subr.mxu0 0.0
  %710 = vmatpush1.msra.mxu0 0.0
  %711 = vmatprep.subr.mxu0 0.0
  %712 = vmatpush1.msra.mxu0 0.0
  %713 = vmatprep.subr.mxu0 0.0
  %714 = vmatpush1.msra.mxu0 0.0
  %715 = vmatprep.subr.mxu0 0.0
  %716 = vmatpush1.msra.mxu0 0.0
  %717 = vmatprep.subr.mxu0 0.0
  %718 = vmatpush1.msra.mxu0 0.0
  %719 = vmatprep.subr.mxu0 0.0
  %720 = vmatpush1.msra.mxu0 0.0
  %721 = vmatprep.subr.mxu0 0.0
  %722 = vmatpush1.msra.mxu0 0.0
  %723 = vmatprep.subr.mxu0 0.0
  %724 = vmatpush1.msra.mxu0 0.0
  %725 = vmatprep.subr.mxu0 0.0
  %726 = vmatpush1.msra.mxu0 0.0
  %727 = vmatprep.subr.mxu0 0.0
  %728 = vmatpush1.msra.mxu0 0.0
  %729 = vmatprep.subr.mxu0 0.0
  %730 = vmatpush1.msra.mxu0 0.0
  %731 = vmatprep.subr.mxu0 0.0
  %732 = vmatpush1.msra.mxu0 0.0
  %733 = vmatprep.subr.mxu0 0.0
  %734 = vmatpush1.msra.mxu0 0.0
  %735 = vmatprep.subr.mxu0 0.0
  %736 = vmatpush1.msra.mxu0 0.0
  %737 = vmatprep.subr.mxu0 0.0
  %738 = vmatpush1.msra.mxu0 0.0
  %739 = vmatprep.subr.mxu0 0.0
  %740 = vmatpush1.msra.mxu0 0.0
  %741 = vmatprep.subr.mxu0 0.0
  %742 = vmatpush1.msra.mxu0 0.0
  %743 = vmatprep.subr.mxu0 0.0
  %744 = vmatpush1.msra.mxu0 0.0
  %745 = vmatprep.subr.mxu0 0.0
  %746 = vmatpush1.msra.mxu0 0.0
  %747 = vmatprep.subr.mxu0 0.0
  %748 = vmatpush1.msra.mxu0 0.0
  %749 = vmatprep.subr.mxu0 0.0
  %750 = vmatpush1.msra.mxu0 0.0
  %751 = vmatprep.subr.mxu0 0.0
  %752 = vmatpush1.msra.mxu0 0.0
  %753 = vmatprep.subr.mxu0 0.0
  %754 = vmatpush1.msra.mxu0 0.0
  %755 = vmatprep.mubr.f32.mxu0 0.0
  %756 = vmatmul.mubr.f32.gmra.mrb[0].mxu0 %v689
  %v757 = vpop.f32.mrb[0].mxu0
  %v758 = vadd.f32 0.0, %v757
  %v759 = vpop.f32.mrb[0].mxu0
  %760 = vdwg.mxu0
  %v761 = vadd.f32 %v685, %v758
  %v762 = vxor.u32 %v761, 2147483648
  %v763 = vmul.f32 %v762, 1.442695
  %v764 = vpow.pop %v763
  %v765 = vadd.f32 %v764, 1.0
  %v766 = vrcp.pop %v765
  %v767 = vmul.f32 1.0, %v766
  %v768 = vtanh.pop %v761
  %v769 = vmul.f32 %v767, %v677
  %771 = vrot.lane.b32.xlu0 %v768, 32
  %v772 = vpop.permute.xlu0 %771
  %v774 = vmul.f32 %v767, %v772
  %776 = vrot.lane.b32.xlu0 %v774, 32
  %v777 = vpop.permute.xlu0 %776
  %v779 = vadd.f32 %v769, %v777
  %v780 = vtanh.pop %v779
  %782 = vrot.lane.b32.xlu0 %v780, 32
  %v783 = vpop.permute.xlu0 %782
  %v785 = vmul.f32 %v767, %v783
  %s786 = scalar_lea.vmem [#allocation2], 48
  %v787 = vld [vmem:[%s786] sm:$0xff]
  %789 = vrot.lane.b32.xlu0 %v785, 64
  %v790 = vpop.permute.xlu0 %789
  %v791 = vsel %vm177, %v790, 0
  %793 = vmatprep.subr.mxu0 0.0
  %794 = vmatpush1.msra.mxu0 %v172
  %795 = vmatprep.subr.mxu0 0.0
  %796 = vmatpush1.msra.mxu0 %v173
  %797 = vmatprep.subr.mxu0 0.0
  %798 = vmatpush1.msra.mxu0 %v174
  %799 = vmatprep.subr.mxu0 0.0
  %800 = vmatpush1.msra.mxu0 %v175
  %801 = vmatprep.subr.mxu0 0.0
  %802 = vmatpush1.msra.mxu0 0.0
  %803 = vmatprep.subr.mxu0 0.0
  %804 = vmatpush1.msra.mxu0 0.0
  %805 = vmatprep.subr.mxu0 0.0
  %806 = vmatpush1.msra.mxu0 0.0
  %807 = vmatprep.subr.mxu0 0.0
  %808 = vmatpush1.msra.mxu0 0.0
  %809 = vmatprep.subr.mxu0 0.0
  %810 = vmatpush1.msra.mxu0 0.0
  %811 = vmatprep.subr.mxu0 0.0
  %812 = vmatpush1.msra.mxu0 0.0
  %813 = vmatprep.subr.mxu0 0.0
  %814 = vmatpush1.msra.mxu0 0.0
  %815 = vmatprep.subr.mxu0 0.0
  %816 = vmatpush1.msra.mxu0 0.0
  %817 = vmatprep.subr.mxu0 0.0
  %818 = vmatpush1.msra.mxu0 0.0
  %819 = vmatprep.subr.mxu0 0.0
  %820 = vmatpush1.msra.mxu0 0.0
  %821 = vmatprep.subr.mxu0 0.0
  %822 = vmatpush1.msra.mxu0 0.0
  %823 = vmatprep.subr.mxu0 0.0
  %824 = vmatpush1.msra.mxu0 0.0
  %825 = vmatprep.subr.mxu0 0.0
  %826 = vmatpush1.msra.mxu0 0.0
  %827 = vmatprep.subr.mxu0 0.0
  %828 = vmatpush1.msra.mxu0 0.0
  %829 = vmatprep.subr.mxu0 0.0
  %830 = vmatpush1.msra.mxu0 0.0
  %831 = vmatprep.subr.mxu0 0.0
  %832 = vmatpush1.msra.mxu0 0.0
  %833 = vmatprep.subr.mxu0 0.0
  %834 = vmatpush1.msra.mxu0 0.0
  %835 = vmatprep.subr.mxu0 0.0
  %836 = vmatpush1.msra.mxu0 0.0
  %837 = vmatprep.subr.mxu0 0.0
  %838 = vmatpush1.msra.mxu0 0.0
  %839 = vmatprep.subr.mxu0 0.0
  %840 = vmatpush1.msra.mxu0 0.0
  %841 = vmatprep.subr.mxu0 0.0
  %842 = vmatpush1.msra.mxu0 0.0
  %843 = vmatprep.subr.mxu0 0.0
  %844 = vmatpush1.msra.mxu0 0.0
  %845 = vmatprep.subr.mxu0 0.0
  %846 = vmatpush1.msra.mxu0 0.0
  %847 = vmatprep.subr.mxu0 0.0
  %848 = vmatpush1.msra.mxu0 0.0
  %849 = vmatprep.subr.mxu0 0.0
  %850 = vmatpush1.msra.mxu0 0.0
  %851 = vmatprep.subr.mxu0 0.0
  %852 = vmatpush1.msra.mxu0 0.0
  %853 = vmatprep.subr.mxu0 0.0
  %854 = vmatpush1.msra.mxu0 0.0
  %855 = vmatprep.subr.mxu0 0.0
  %856 = vmatpush1.msra.mxu0 0.0
  %857 = vmatprep.mubr.f32.mxu0 0.0
  %858 = vmatmul.mubr.f32.gmra.mrb[0].mxu0 %v791
  %v859 = vpop.f32.mrb[0].mxu0
  %v860 = vadd.f32 0.0, %v859
  %v861 = vpop.f32.mrb[0].mxu0
  %862 = vdwg.mxu0
  %v863 = vadd.f32 %v787, %v860
  %v864 = vxor.u32 %v863, 2147483648
  %v865 = vmul.f32 %v864, 1.442695
  %v866 = vpow.pop %v865
  %v867 = vadd.f32 %v866, 1.0
  %v868 = vrcp.pop %v867
  %v869 = vmul.f32 1.0, %v868
  %v870 = vtanh.pop %v863
  %v871 = vmul.f32 %v869, %v779
  %873 = vrot.lane.b32.xlu0 %v870, 32
  %v874 = vpop.permute.xlu0 %873
  %v876 = vmul.f32 %v869, %v874
  %878 = vrot.lane.b32.xlu0 %v876, 32
  %v879 = vpop.permute.xlu0 %878
  %v881 = vadd.f32 %v871, %v879
  %v882 = vtanh.pop %v881
  %884 = vrot.lane.b32.xlu0 %v882, 32
  %v885 = vpop.permute.xlu0 %884
  %v887 = vmul.f32 %v869, %v885
  %s888 = scalar_lea.vmem [#allocation2], 56
  %v889 = vld [vmem:[%s888] sm:$0xff]
  %891 = vrot.lane.b32.xlu0 %v887, 64
  %v892 = vpop.permute.xlu0 %891
  %v893 = vsel %vm177, %v892, 0
  %895 = vmatprep.subr.mxu0 0.0
  %896 = vmatpush1.msra.mxu0 %v172
  %897 = vmatprep.subr.mxu0 0.0
  %898 = vmatpush1.msra.mxu0 %v173
  %899 = vmatprep.subr.mxu0 0.0
  %900 = vmatpush1.msra.mxu0 %v174
  %901 = vmatprep.subr.mxu0 0.0
  %902 = vmatpush1.msra.mxu0 %v175
  %903 = vmatprep.subr.mxu0 0.0
  %904 = vmatpush1.msra.mxu0 0.0
  %905 = vmatprep.subr.mxu0 0.0
  %906 = vmatpush1.msra.mxu0 0.0
  %907 = vmatprep.subr.mxu0 0.0
  %908 = vmatpush1.msra.mxu0 0.0
  %909 = vmatprep.subr.mxu0 0.0
  %910 = vmatpush1.msra.mxu0 0.0
  %911 = vmatprep.subr.mxu0 0.0
  %912 = vmatpush1.msra.mxu0 0.0
  %913 = vmatprep.subr.mxu0 0.0
  %914 = vmatpush1.msra.mxu0 0.0
  %915 = vmatprep.subr.mxu0 0.0
  %916 = vmatpush1.msra.mxu0 0.0
  %917 = vmatprep.subr.mxu0 0.0
  %918 = vmatpush1.msra.mxu0 0.0
  %919 = vmatprep.subr.mxu0 0.0
  %920 = vmatpush1.msra.mxu0 0.0
  %921 = vmatprep.subr.mxu0 0.0
  %922 = vmatpush1.msra.mxu0 0.0
  %923 = vmatprep.subr.mxu0 0.0
  %924 = vmatpush1.msra.mxu0 0.0
  %925 = vmatprep.subr.mxu0 0.0
  %926 = vmatpush1.msra.mxu0 0.0
  %927 = vmatprep.subr.mxu0 0.0
  %928 = vmatpush1.msra.mxu0 0.0
  %929 = vmatprep.subr.mxu0 0.0
  %930 = vmatpush1.msra.mxu0 0.0
  %931 = vmatprep.subr.mxu0 0.0
  %932 = vmatpush1.msra.mxu0 0.0
  %933 = vmatprep.subr.mxu0 0.0
  %934 = vmatpush1.msra.mxu0 0.0
  %935 = vmatprep.subr.mxu0 0.0
  %936 = vmatpush1.msra.mxu0 0.0
  %937 = vmatprep.subr.mxu0 0.0
  %938 = vmatpush1.msra.mxu0 0.0
  %939 = vmatprep.subr.mxu0 0.0
  %940 = vmatpush1.msra.mxu0 0.0
  %941 = vmatprep.subr.mxu0 0.0
  %942 = vmatpush1.msra.mxu0 0.0
  %943 = vmatprep.subr.mxu0 0.0
  %944 = vmatpush1.msra.mxu0 0.0
  %945 = vmatprep.subr.mxu0 0.0
  %946 = vmatpush1.msra.mxu0 0.0
  %947 = vmatprep.subr.mxu0 0.0
  %948 = vmatpush1.msra.mxu0 0.0
  %949 = vmatprep.subr.mxu0 0.0
  %950 = vmatpush1.msra.mxu0 0.0
  %951 = vmatprep.subr.mxu0 0.0
  %952 = vmatpush1.msra.mxu0 0.0
  %953 = vmatprep.subr.mxu0 0.0
  %954 = vmatpush1.msra.mxu0 0.0
  %955 = vmatprep.subr.mxu0 0.0
  %956 = vmatpush1.msra.mxu0 0.0
  %957 = vmatprep.subr.mxu0 0.0
  %958 = vmatpush1.msra.mxu0 0.0
  %959 = vmatprep.mubr.f32.mxu0 0.0
  %960 = vmatmul.mubr.f32.gmra.mrb[0].mxu0 %v893
  %v961 = vpop.f32.mrb[0].mxu0
  %v962 = vadd.f32 0.0, %v961
  %v963 = vpop.f32.mrb[0].mxu0
  %964 = vdwg.mxu0
  %v965 = vadd.f32 %v889, %v962
  %v966 = vxor.u32 %v965, 2147483648
  %v967 = vmul.f32 %v966, 1.442695
  %v968 = vpow.pop %v967
  %v969 = vadd.f32 %v968, 1.0
  %v970 = vrcp.pop %v969
  %v971 = vmul.f32 1.0, %v970
  %v972 = vtanh.pop %v965
  %v973 = vmul.f32 %v971, %v881
  %975 = vrot.lane.b32.xlu0 %v972, 32
  %v976 = vpop.permute.xlu0 %975
  %v978 = vmul.f32 %v971, %v976
  %980 = vrot.lane.b32.xlu0 %v978, 32
  %v981 = vpop.permute.xlu0 %980
  %v983 = vadd.f32 %v973, %v981
  %v984 = vtanh.pop %v983
  %986 = vrot.lane.b32.xlu0 %v984, 32
  %v987 = vpop.permute.xlu0 %986
  %v989 = vmul.f32 %v971, %v987
  %991 = vrot.lane.b32.xlu0 %v989, 64
  %v992 = vpop.permute.xlu0 %991
  %994 = vst.msk [vmem:[%s4] sm:$0xff] %vm177, %v992
  // Predicated region
  $region18: #{lstm_forward.1} parent=0 // pred_check
    _
  $region19: #{lstm_forward.1} parent=0 // pred_check_branch
    %996 = sbr.rel (0) target = $region21
  $region20: #{lstm_forward.1} parent=0 // pred_region
    _
  $region21: #{lstm_forward.1} parent=0 // pred_fallthru
    _
  // Predicated region
  $region22: #{lstm_forward.1} parent=0 // pred_check
    _
  $region23: #{lstm_forward.1} parent=0 // pred_check_branch
    %998 = sbr.rel (0) target = $region25
  $region24: #{lstm_forward.1} parent=0 // pred_region
    _
  $region25: #{lstm_forward.1} parent=0 // pred_fallthru
    _

</llo_original>
